<compile_context>
chip_gen: v7x
topology: tpu7x:2x2x1
jax: 0.10.0
libtpu: 0.0.40
codegen_flags: <defaults>
</compile_context>

<pallas_src>
import functools

import jax
import jax.numpy as jnp
from jax.experimental import pallas as pl
from jax.experimental.pallas import tpu as pltpu

LANE = 128
SUBLANE_F32 = 8


def _round_up(x, m):
    return ((x + m - 1) // m) * m


def _fused_latent_kernel(z_ref,
                         dw1_ref, db1_ref, dw2_ref, db2_ref,
                         mw1_ref, mb1_ref, mw2_ref, mb2_ref,
                         out_ref):
    """decoder(z) -> x ; model(x) -> out. bf16 at the MXU, f32 accumulate/elementwise."""
    z = z_ref[...].astype(jnp.bfloat16)

    # ---- decoder: Linear -> ReLU -> Linear -------------------------------
    h = jnp.dot(z, dw1_ref[...], preferred_element_type=jnp.float32) + db1_ref[...]
    h = jnp.maximum(h, 0.0)
    x = jnp.dot(h.astype(jnp.bfloat16), dw2_ref[...],
                preferred_element_type=jnp.float32) + db2_ref[...]
    # x is the decoded input, flat (TILE_B, T*F_pad) == row-major (B, T, F) padded

    # ---- model: Linear -> ReLU -> Linear ---------------------------------
    g = jnp.dot(x.astype(jnp.bfloat16), mw1_ref[...],
                preferred_element_type=jnp.float32) + mb1_ref[...]
    g = jnp.maximum(g, 0.0)
    out = jnp.dot(g.astype(jnp.bfloat16), mw2_ref[...],
                  preferred_element_type=jnp.float32) + mb2_ref[...]

    out_ref[...] = out.astype(out_ref.dtype)


@functools.partial(jax.jit, static_argnames=("out_dim", "tile_b"))
def latent_model_wrapper_forward(z, params, out_dim, tile_b=256):
    """JAX/Pallas equivalent of LatentModelWrapper.forward (params are pre-padded)."""
    if z.ndim == 1:
        z = z[None, :]  # unsqueeze(0)

    dw1, db1, dw2, db2, mw1, mb1, mw2, mb2 = params
    B, L = z.shape
    L_pad, H_pad = dw1.shape
    TF_pad = dw2.shape[1]
    MH_pad = mw1.shape[1]
    O_pad = mw2.shape[1]

    # Batch tile: multiple of the f32 sublane (8), capped by the (padded) batch size.
    tile = max(SUBLANE_F32, min(_round_up(tile_b, SUBLANE_F32),
                                _round_up(B, SUBLANE_F32)))
    B_pad = _round_up(B, tile)

    # Pad latent to the lane-dense L_pad and batch to a tile multiple (zeros are inert:
    # padded weight rows/cols are zero).
    z_pad = jnp.zeros((B_pad, L_pad), jnp.float32).at[:B, :L].set(z.astype(jnp.float32))

    grid = (B_pad // tile,)

    # Weights/biases: constant block index => no re-DMA across grid steps (VMEM-resident).
    def const_spec(shape):
        return pl.BlockSpec(shape, lambda b: (0,) * len(shape))

    in_specs = [
        pl.BlockSpec((tile, L_pad), lambda b: (b, 0)),      # streamed z tile
        const_spec(dw1.shape), const_spec(db1.shape),
        const_spec(dw2.shape), const_spec(db2.shape),
        const_spec(mw1.shape), const_spec(mb1.shape),
        const_spec(mw2.shape), const_spec(mb2.shape),
    ]
    out_specs = pl.BlockSpec((tile, O_pad), lambda b: (b, 0))

    # VMEM budget (portable: checked against v7x's 64 MiB, not v5e/v6e's 128 MiB).
    weight_bytes = sum(int(w.size) * w.dtype.itemsize
                       for w in (dw1, db1, dw2, db2, mw1, mb1, mw2, mb2))
    stream_bytes = 2 * tile * (L_pad + O_pad) * 4            # double-buffered z/out tiles
    interm_bytes = tile * (H_pad + TF_pad + MH_pad + O_pad) * 4
    vmem_budget = int(1.5 * (2 * weight_bytes + stream_bytes + interm_bytes)) + (4 << 20)
    vmem_budget = min(vmem_budget, 64 * 1024 * 1024)

    flops = 2 * B_pad * (L_pad * H_pad + H_pad * TF_pad + TF_pad * MH_pad + MH_pad * O_pad)
    bytes_accessed = B_pad * L_pad * 4 + weight_bytes + B_pad * O_pad * 4

    out = pl.pallas_call(
        _fused_latent_kernel,
        grid=grid,
        in_specs=in_specs,
        out_specs=out_specs,
        out_shape=jax.ShapeDtypeStruct((B_pad, O_pad), jnp.float32),
        compiler_params=pltpu.CompilerParams(
            dimension_semantics=("parallel",),               # shard batch tiles over TCs
            vmem_limit_bytes=vmem_budget),
        cost_estimate=pl.CostEstimate(
            flops=flops, transcendentals=0, bytes_accessed=bytes_accessed),
    )(z_pad, dw1, db1, dw2, db2, mw1, mb1, mw2, mb2)

    # Slice back to logical (B, out_dim) outside the kernel (store stays lane-dense).
    return out[:B, :out_dim]


def make_params(latent_dim, hidden, t, f, model_hidden, out_dim):
    """Deterministic synthetic parameters, zero-padded to lane-dense (128) dims.

    Weights are stored (in, out) -- transpose of nn.Linear's (out, in) -- and cast to
    bf16 (MXU-native, half the VMEM); biases stay f32.
    """
    key = jax.random.PRNGKey(0)
    ks = jax.random.split(key, 8)
    in_dim = t * f

    L_pad = _round_up(latent_dim, LANE)
    H_pad = _round_up(hidden, LANE)
    TF_pad = _round_up(in_dim, LANE)
    MH_pad = _round_up(model_hidden, LANE)
    O_pad = _round_up(out_dim, LANE)

    def lin(k, fan_in, fan_out, fan_in_pad, fan_out_pad):
        scale = 1.0 / jnp.sqrt(jnp.float32(fan_in))
        w = jax.random.uniform(k, (fan_in, fan_out), jnp.float32, -scale, scale)
        w = jnp.zeros((fan_in_pad, fan_out_pad), jnp.float32).at[:fan_in, :fan_out].set(w)
        return w.astype(jnp.bfloat16)

    def bias(k, n, n_pad):
        b = jax.random.uniform(k, (1, n), jnp.float32, -0.1, 0.1)
        return jnp.zeros((1, n_pad), jnp.float32).at[:, :n].set(b)

    dw1 = lin(ks[0], latent_dim, hidden, L_pad, H_pad)
    db1 = bias(ks[1], hidden, H_pad)
    dw2 = lin(ks[2], hidden, in_dim, H_pad, TF_pad)
    db2 = bias(ks[3], in_dim, TF_pad)
    mw1 = lin(ks[4], in_dim, model_hidden, TF_pad, MH_pad)
    mb1 = bias(ks[5], model_hidden, MH_pad)
    mw2 = lin(ks[6], model_hidden, out_dim, MH_pad, O_pad)
    mb2 = bias(ks[7], out_dim, O_pad)
    return (dw1, db1, dw2, db2, mw1, mb1, mw2, mb2)


def _reference_forward(z, params, out_dim):
    """Pure-JAX reference with the same bf16-at-matmul / f32-accumulate semantics."""
    if z.ndim == 1:
        z = z[None, :]
    dw1, db1, dw2, db2, mw1, mb1, mw2, mb2 = params
    L_pad = dw1.shape[0]
    zp = jnp.pad(z.astype(jnp.float32), ((0, 0), (0, L_pad - z.shape[1])))
    h = jnp.maximum(jnp.dot(zp.astype(jnp.bfloat16), dw1,
                            preferred_element_type=jnp.float32) + db1, 0.0)
    x = jnp.dot(h.astype(jnp.bfloat16), dw2,
                preferred_element_type=jnp.float32) + db2
    g = jnp.maximum(jnp.dot(x.astype(jnp.bfloat16), mw1,
                            preferred_element_type=jnp.float32) + mb1, 0.0)
    out = jnp.dot(g.astype(jnp.bfloat16), mw2,
                  preferred_element_type=jnp.float32) + mb2
    return out[:, :out_dim]


if __name__ == "__main__":
    # Small shapes consistent with the module's forward semantics.
    B, L = 2, 8            # batch, latent dim
    HIDDEN = 32            # decoder hidden
    T, F = 8, 4            # decoded input: (B, T, F) -> flat T*F = 32
    MODEL_HIDDEN = 32
    OUT_DIM = 4

    params = make_params(L, HIDDEN, T, F, MODEL_HIDDEN, OUT_DIM)

    key = jax.random.PRNGKey(0)
    z_batch = jax.random.normal(key, (B, L), jnp.float32)
    z_single = z_batch[0]  # 1-D latent: exercises the unsqueeze path

    out_batch = jax.block_until_ready(
        latent_model_wrapper_forward(z_batch, params, out_dim=OUT_DIM))
    out_single = jax.block_until_ready(
        latent_model_wrapper_forward(z_single, params, out_dim=OUT_DIM))

    ref_batch = _reference_forward(z_batch, params, OUT_DIM)
    ref_single = _reference_forward(z_single, params, OUT_DIM)

    assert out_batch.shape == (B, OUT_DIM)
    assert out_single.shape == (1, OUT_DIM)
    assert jnp.allclose(out_batch, ref_batch, atol=1e-3, rtol=1e-3)
    assert jnp.allclose(out_single, ref_single, atol=1e-3, rtol=1e-3)

    print("KERNEL_OK")
</pallas_src>

<mosaic_0001>
module attributes {stable_mosaic.version = 11 : i64} {
  func.func @_fused_latent_kernel(%arg0: i32, %arg1: memref<8x128xf32, #tpu.memory_space<vmem>>, %arg2: memref<128x128xbf16, #tpu.memory_space<vmem>>, %arg3: memref<1x128xf32, #tpu.memory_space<vmem>>, %arg4: memref<128x128xbf16, #tpu.memory_space<vmem>>, %arg5: memref<1x128xf32, #tpu.memory_space<vmem>>, %arg6: memref<128x128xbf16, #tpu.memory_space<vmem>>, %arg7: memref<1x128xf32, #tpu.memory_space<vmem>>, %arg8: memref<128x128xbf16, #tpu.memory_space<vmem>>, %arg9: memref<1x128xf32, #tpu.memory_space<vmem>>, %arg10: memref<8x128xf32, #tpu.memory_space<vmem>>) attributes {dimension_semantics = [#tpu.dimension_semantics<parallel>], iteration_bounds = array<i64: 1>, scalar_prefetch = 0 : i64, scratch_operands = 0 : i64, tpu.core_type = #tpu.core_type<tc>, window_params = [{transform_indices = @transform_0, window_bounds = array<i64: 8, 128>}, {pipeline_mode = #tpu.pipeline_mode<synchronous>, transform_indices = @transform_1, window_bounds = array<i64: 128, 128>}, {pipeline_mode = #tpu.pipeline_mode<synchronous>, transform_indices = @transform_2, window_bounds = array<i64: 1, 128>}, {pipeline_mode = #tpu.pipeline_mode<synchronous>, transform_indices = @transform_3, window_bounds = array<i64: 128, 128>}, {pipeline_mode = #tpu.pipeline_mode<synchronous>, transform_indices = @transform_4, window_bounds = array<i64: 1, 128>}, {pipeline_mode = #tpu.pipeline_mode<synchronous>, transform_indices = @transform_5, window_bounds = array<i64: 128, 128>}, {pipeline_mode = #tpu.pipeline_mode<synchronous>, transform_indices = @transform_6, window_bounds = array<i64: 1, 128>}, {pipeline_mode = #tpu.pipeline_mode<synchronous>, transform_indices = @transform_7, window_bounds = array<i64: 128, 128>}, {pipeline_mode = #tpu.pipeline_mode<synchronous>, transform_indices = @transform_8, window_bounds = array<i64: 1, 128>}, {transform_indices = @transform_9, window_bounds = array<i64: 8, 128>}]} {
    %c0 = arith.constant 0 : index
    %c0_0 = arith.constant 0 : index
    %0 = vector.load %arg1[%c0, %c0_0] : memref<8x128xf32, #tpu.memory_space<vmem>>, vector<8x128xf32>
    %1 = arith.truncf %0 : vector<8x128xf32> to vector<8x128xbf16>
    %c0_1 = arith.constant 0 : index
    %c0_2 = arith.constant 0 : index
    %2 = vector.load %arg2[%c0_1, %c0_2] : memref<128x128xbf16, #tpu.memory_space<vmem>>, vector<128x128xbf16>
    %cst = arith.constant dense<0.000000e+00> : vector<8x128xf32>
    %3 = tpu.matmul %1, %2, %cst {dimension_numbers = #tpu.dot_dimension_numbers<[1], [0], [0], [1], [0, 0, 1, 1], [], []>} : vector<8x128xbf16>, vector<128x128xbf16>, vector<8x128xf32> -> vector<8x128xf32>
    %c0_3 = arith.constant 0 : index
    %c0_4 = arith.constant 0 : index
    %4 = vector.load %arg3[%c0_3, %c0_4] : memref<1x128xf32, #tpu.memory_space<vmem>>, vector<1x128xf32>
    %5 = vector.broadcast %4 : vector<1x128xf32> to vector<8x128xf32>
    %6 = arith.addf %3, %5 : vector<8x128xf32>
    %cst_5 = arith.constant 0.000000e+00 : f32
    %7 = vector.broadcast %cst_5 : f32 to vector<8x128xf32>
    %8 = arith.maximumf %6, %7 : vector<8x128xf32>
    %9 = arith.truncf %8 : vector<8x128xf32> to vector<8x128xbf16>
    %c0_6 = arith.constant 0 : index
    %c0_7 = arith.constant 0 : index
    %10 = vector.load %arg4[%c0_6, %c0_7] : memref<128x128xbf16, #tpu.memory_space<vmem>>, vector<128x128xbf16>
    %cst_8 = arith.constant dense<0.000000e+00> : vector<8x128xf32>
    %11 = tpu.matmul %9, %10, %cst_8 {dimension_numbers = #tpu.dot_dimension_numbers<[1], [0], [0], [1], [0, 0, 1, 1], [], []>} : vector<8x128xbf16>, vector<128x128xbf16>, vector<8x128xf32> -> vector<8x128xf32>
    %c0_9 = arith.constant 0 : index
    %c0_10 = arith.constant 0 : index
    %12 = vector.load %arg5[%c0_9, %c0_10] : memref<1x128xf32, #tpu.memory_space<vmem>>, vector<1x128xf32>
    %13 = vector.broadcast %12 : vector<1x128xf32> to vector<8x128xf32>
    %14 = arith.addf %11, %13 : vector<8x128xf32>
    %15 = arith.truncf %14 : vector<8x128xf32> to vector<8x128xbf16>
    %c0_11 = arith.constant 0 : index
    %c0_12 = arith.constant 0 : index
    %16 = vector.load %arg6[%c0_11, %c0_12] : memref<128x128xbf16, #tpu.memory_space<vmem>>, vector<128x128xbf16>
    %cst_13 = arith.constant dense<0.000000e+00> : vector<8x128xf32>
    %17 = tpu.matmul %15, %16, %cst_13 {dimension_numbers = #tpu.dot_dimension_numbers<[1], [0], [0], [1], [0, 0, 1, 1], [], []>} : vector<8x128xbf16>, vector<128x128xbf16>, vector<8x128xf32> -> vector<8x128xf32>
    %c0_14 = arith.constant 0 : index
    %c0_15 = arith.constant 0 : index
    %18 = vector.load %arg7[%c0_14, %c0_15] : memref<1x128xf32, #tpu.memory_space<vmem>>, vector<1x128xf32>
    %19 = vector.broadcast %18 : vector<1x128xf32> to vector<8x128xf32>
    %20 = arith.addf %17, %19 : vector<8x128xf32>
    %cst_16 = arith.constant 0.000000e+00 : f32
    %21 = vector.broadcast %cst_16 : f32 to vector<8x128xf32>
    %22 = arith.maximumf %20, %21 : vector<8x128xf32>
    %23 = arith.truncf %22 : vector<8x128xf32> to vector<8x128xbf16>
    %c0_17 = arith.constant 0 : index
    %c0_18 = arith.constant 0 : index
    %24 = vector.load %arg8[%c0_17, %c0_18] : memref<128x128xbf16, #tpu.memory_space<vmem>>, vector<128x128xbf16>
    %cst_19 = arith.constant dense<0.000000e+00> : vector<8x128xf32>
    %25 = tpu.matmul %23, %24, %cst_19 {dimension_numbers = #tpu.dot_dimension_numbers<[1], [0], [0], [1], [0, 0, 1, 1], [], []>} : vector<8x128xbf16>, vector<128x128xbf16>, vector<8x128xf32> -> vector<8x128xf32>
    %c0_20 = arith.constant 0 : index
    %c0_21 = arith.constant 0 : index
    %26 = vector.load %arg9[%c0_20, %c0_21] : memref<1x128xf32, #tpu.memory_space<vmem>>, vector<1x128xf32>
    %27 = vector.broadcast %26 : vector<1x128xf32> to vector<8x128xf32>
    %28 = arith.addf %25, %27 : vector<8x128xf32>
    %c0_22 = arith.constant 0 : index
    %c0_23 = arith.constant 0 : index
    %29 = vector.load %arg10[%c0_22, %c0_23] : memref<8x128xf32, #tpu.memory_space<vmem>>, vector<8x128xf32>
    tpu.vector_store %arg10[%c0_22, %c0_23], %28 {strides = array<i32>} : memref<8x128xf32, #tpu.memory_space<vmem>>, vector<8x128xf32>,
    return
  }
  func.func @transform_0(%arg0: i32) -> (i32, i32) {
    %c0_i32 = arith.constant 0 : i32
    %c0_i32_0 = arith.constant 0 : i32
    return %arg0, %c0_i32 : i32, i32
  }
  func.func @transform_1(%arg0: i32) -> (i32, i32) {
    %c0_i32 = arith.constant 0 : i32
    %c0_i32_0 = arith.constant 0 : i32
    %c0_i32_1 = arith.constant 0 : i32
    return %c0_i32, %c0_i32_0 : i32, i32
  }
  func.func @transform_2(%arg0: i32) -> (i32, i32) {
    %c0_i32 = arith.constant 0 : i32
    %c0_i32_0 = arith.constant 0 : i32
    %c0_i32_1 = arith.constant 0 : i32
    return %c0_i32, %c0_i32_0 : i32, i32
  }
  func.func @transform_3(%arg0: i32) -> (i32, i32) {
    %c0_i32 = arith.constant 0 : i32
    %c0_i32_0 = arith.constant 0 : i32
    %c0_i32_1 = arith.constant 0 : i32
    return %c0_i32, %c0_i32_0 : i32, i32
  }
  func.func @transform_4(%arg0: i32) -> (i32, i32) {
    %c0_i32 = arith.constant 0 : i32
    %c0_i32_0 = arith.constant 0 : i32
    %c0_i32_1 = arith.constant 0 : i32
    return %c0_i32, %c0_i32_0 : i32, i32
  }
  func.func @transform_5(%arg0: i32) -> (i32, i32) {
    %c0_i32 = arith.constant 0 : i32
    %c0_i32_0 = arith.constant 0 : i32
    %c0_i32_1 = arith.constant 0 : i32
    return %c0_i32, %c0_i32_0 : i32, i32
  }
  func.func @transform_6(%arg0: i32) -> (i32, i32) {
    %c0_i32 = arith.constant 0 : i32
    %c0_i32_0 = arith.constant 0 : i32
    %c0_i32_1 = arith.constant 0 : i32
    return %c0_i32, %c0_i32_0 : i32, i32
  }
  func.func @transform_7(%arg0: i32) -> (i32, i32) {
    %c0_i32 = arith.constant 0 : i32
    %c0_i32_0 = arith.constant 0 : i32
    %c0_i32_1 = arith.constant 0 : i32
    return %c0_i32, %c0_i32_0 : i32, i32
  }
  func.func @transform_8(%arg0: i32) -> (i32, i32) {
    %c0_i32 = arith.constant 0 : i32
    %c0_i32_0 = arith.constant 0 : i32
    %c0_i32_1 = arith.constant 0 : i32
    return %c0_i32, %c0_i32_0 : i32, i32
  }
  func.func @transform_9(%arg0: i32) -> (i32, i32) {
    %c0_i32 = arith.constant 0 : i32
    %c0_i32_0 = arith.constant 0 : i32
    return %arg0, %c0_i32 : i32, i32
  }
}

</mosaic_0001>

<llo_original>
// kernel: latent_model_wrapper_forward.1
$region0: #{latent_model_wrapper_forward.1}
  #allocation0 [shape = 'u32[]', space=smem, size = 0x4, offset = 0x4, fixed_abs, tag = 'smem constant byte address 0x4 - core index']
  #allocation1 [shape = 'u32[144,128]{1,0:T(1,128)}', space=vmem, size = 0x12000, scoped, tag = 'internal scratch']
  %s0 = inlined_call_operand.vmem [shape: f32[8,128], index: 0, kind: input, shape index: {}]
  %s1 = inlined_call_operand.hbm [shape: bf16[128,128], index: 1, kind: input, shape index: {}]
  %s2 = inlined_call_operand.vmem [shape: f32[1,128], index: 2, kind: input, shape index: {}]
  %s3 = inlined_call_operand.hbm [shape: bf16[128,128], index: 3, kind: input, shape index: {}]
  %s4 = inlined_call_operand.vmem [shape: f32[1,128], index: 4, kind: input, shape index: {}]
  %s5 = inlined_call_operand.hbm [shape: bf16[128,128], index: 5, kind: input, shape index: {}]
  %s6 = inlined_call_operand.vmem [shape: f32[1,128], index: 6, kind: input, shape index: {}]
  %s7 = inlined_call_operand.hbm [shape: bf16[128,128], index: 7, kind: input, shape index: {}]
  %s8 = inlined_call_operand.vmem [shape: f32[1,128], index: 8, kind: input, shape index: {}]
  %s9 = inlined_call_operand.vmem [shape: f32[8,128], index: 9, kind: output, shape index: {}]
  %s10 = sld [smem:[#allocation0]]
  $region62: #{latent_model_wrapper_forward.1} parent=0
    _
  %s12 = ssub.s32 1, %s10
  %s13 = scalar_select 0, %s12, %s10
  $region1: #{latent_model_wrapper_forward.1} parent=0
    #allocation2 [shape = 'u8[32768]{0}', space=vmem, size = 0x8000, scoped, tag = 'input window, operand 1, single buffered']
    #allocation3 [shape = 's32[1]{0}', space=sflag, size = 0x4, scoped, tag = 'scoped memory for latent_model_wrapper_forward.1']
    #allocation4 [shape = 'u8[32768]{0}', space=vmem, size = 0x8000, scoped, tag = 'input window, operand 3, single buffered']
    #allocation5 [shape = 's32[1]{0}', space=sflag, size = 0x4, scoped, tag = 'scoped memory for latent_model_wrapper_forward.1']
    #allocation6 [shape = 'u8[32768]{0}', space=vmem, size = 0x8000, scoped, tag = 'input window, operand 5, single buffered']
    #allocation7 [shape = 'u8[32768]{0}', space=vmem, size = 0x8000, scoped, tag = 'input window, operand 7, single buffered']
    #allocation8 [shape = 's32[1]{0}', space=sflag, size = 0x4, scoped, tag = 'scoped memory for latent_model_wrapper_forward.1']
    %14 = vsyncpa [#allocation3], 0
    %15 = vsyncpa [#allocation5], 0
    %16 = vsyncpa [#allocation8], 0
    // Predicated region
    $region2: #{latent_model_wrapper_forward.1} parent=1 // pred_check
      _
    $region3: #{latent_model_wrapper_forward.1} parent=1 // pred_check_branch
      %18 = sbr.rel (0) target = $region5
    $region4: #{latent_model_wrapper_forward.1} parent=1 // pred_region
      _
    $region5: #{latent_model_wrapper_forward.1} parent=1 // pred_fallthru
      _
    // Predicated region
    $region6: #{latent_model_wrapper_forward.1} parent=1 // pred_check
      _
    $region7: #{latent_model_wrapper_forward.1} parent=1 // pred_check_branch
      %20 = sbr.rel (0) target = $region9
    $region8: #{latent_model_wrapper_forward.1} parent=1 // pred_region
      %s22 = ssub.s32 1024, 1024
      %23 = vsyncadd [#allocation3], %s22
      %s24 = sshll.u32 [#allocation2], 4
      %s25 = int_to_ptr.vmem [resolvable:$true] %s24
      %30 = dma.hbm_to_vmem [thread:$0]  %s1, 1024, %s25, [#allocation3], 64, 64, 4
    $region9: #{latent_model_wrapper_forward.1} parent=1 // pred_fallthru
      _
    // Predicated region
    $region10: #{latent_model_wrapper_forward.1} parent=1 // pred_check
      _
    $region11: #{latent_model_wrapper_forward.1} parent=1 // pred_check_branch
      %32 = sbr.rel (0) target = $region13
    $region12: #{latent_model_wrapper_forward.1} parent=1 // pred_region
      _
    $region13: #{latent_model_wrapper_forward.1} parent=1 // pred_fallthru
      _
    // Predicated region
    $region14: #{latent_model_wrapper_forward.1} parent=1 // pred_check
      _
    $region15: #{latent_model_wrapper_forward.1} parent=1 // pred_check_branch
      %34 = sbr.rel (0) target = $region17
    $region16: #{latent_model_wrapper_forward.1} parent=1 // pred_region
      %s36 = ssub.s32 1024, 1024
      %37 = vsyncadd [#allocation5], %s36
      %s38 = sshll.u32 [#allocation4], 4
      %s39 = int_to_ptr.vmem [resolvable:$true] %s38
      %44 = dma.hbm_to_vmem [thread:$0]  %s3, 1024, %s39, [#allocation5], 64, 64, 4
    $region17: #{latent_model_wrapper_forward.1} parent=1 // pred_fallthru
      _
    // Predicated region
    $region18: #{latent_model_wrapper_forward.1} parent=1 // pred_check
      _
    $region19: #{latent_model_wrapper_forward.1} parent=1 // pred_check_branch
      %46 = sbr.rel (0) target = $region21
    $region20: #{latent_model_wrapper_forward.1} parent=1 // pred_region
      _
    $region21: #{latent_model_wrapper_forward.1} parent=1 // pred_fallthru
      _
    // Predicated region
    $region22: #{latent_model_wrapper_forward.1} parent=1 // pred_check
      _
    $region23: #{latent_model_wrapper_forward.1} parent=1 // pred_check_branch
      %48 = sbr.rel (0) target = $region25
    $region24: #{latent_model_wrapper_forward.1} parent=1 // pred_region
      %s50 = ssub.s32 1024, 1024
      %51 = vsyncadd [#allocation5], %s50
      %s52 = sshll.u32 [#allocation6], 4
      %s53 = int_to_ptr.vmem [resolvable:$true] %s52
      %58 = dma.hbm_to_vmem [thread:$0]  %s5, 1024, %s53, [#allocation5], 64, 64, 4
    $region25: #{latent_model_wrapper_forward.1} parent=1 // pred_fallthru
      _
    // Predicated region
    $region26: #{latent_model_wrapper_forward.1} parent=1 // pred_check
      _
    $region27: #{latent_model_wrapper_forward.1} parent=1 // pred_check_branch
      %60 = sbr.rel (0) target = $region29
    $region28: #{latent_model_wrapper_forward.1} parent=1 // pred_region
      _
    $region29: #{latent_model_wrapper_forward.1} parent=1 // pred_fallthru
      _
    // Predicated region
    $region30: #{latent_model_wrapper_forward.1} parent=1 // pred_check
      _
    $region31: #{latent_model_wrapper_forward.1} parent=1 // pred_check_branch
      %62 = sbr.rel (0) target = $region33
    $region32: #{latent_model_wrapper_forward.1} parent=1 // pred_region
      %s64 = ssub.s32 1024, 1024
      %65 = vsyncadd [#allocation8], %s64
      %s66 = sshll.u32 [#allocation7], 4
      %s67 = int_to_ptr.vmem [resolvable:$true] %s66
      %72 = dma.hbm_to_vmem [thread:$0]  %s7, 1024, %s67, [#allocation8], 64, 64, 4
    $region33: #{latent_model_wrapper_forward.1} parent=1 // pred_fallthru
      _
    // Predicated region
    $region34: #{latent_model_wrapper_forward.1} parent=1 // pred_check
      _
    $region35: #{latent_model_wrapper_forward.1} parent=1 // pred_check_branch
      %74 = sbr.rel (0) target = $region37
    $region36: #{latent_model_wrapper_forward.1} parent=1 // pred_region
      _
    $region37: #{latent_model_wrapper_forward.1} parent=1 // pred_fallthru
      _
    // Predicated region
    $region38: #{latent_model_wrapper_forward.1} parent=1 // pred_check
      _
    $region39: #{latent_model_wrapper_forward.1} parent=1 // pred_check_branch
      %76 = sbr.rel (0) target = $region41
    $region40: #{latent_model_wrapper_forward.1} parent=1 // pred_region
      %77 = dma.done [#allocation3], 1024
    $region41: #{latent_model_wrapper_forward.1} parent=1 // pred_fallthru
      _
    // Predicated region
    $region42: #{latent_model_wrapper_forward.1} parent=1 // pred_check
      _
    $region43: #{latent_model_wrapper_forward.1} parent=1 // pred_check_branch
      %79 = sbr.rel (0) target = $region45
    $region44: #{latent_model_wrapper_forward.1} parent=1 // pred_region
      %80 = dma.done [#allocation5], 1024
    $region45: #{latent_model_wrapper_forward.1} parent=1 // pred_fallthru
      _
    // Predicated region
    $region46: #{latent_model_wrapper_forward.1} parent=1 // pred_check
      _
    $region47: #{latent_model_wrapper_forward.1} parent=1 // pred_check_branch
      %82 = sbr.rel (0) target = $region49
    $region48: #{latent_model_wrapper_forward.1} parent=1 // pred_region
      %83 = dma.done [#allocation5], 1024
    $region49: #{latent_model_wrapper_forward.1} parent=1 // pred_fallthru
      _
    // Predicated region
    $region50: #{latent_model_wrapper_forward.1} parent=1 // pred_check
      _
    $region51: #{latent_model_wrapper_forward.1} parent=1 // pred_check_branch
      %85 = sbr.rel (0) target = $region53
    $region52: #{latent_model_wrapper_forward.1} parent=1 // pred_region
      %86 = dma.done [#allocation8], 1024
    $region53: #{latent_model_wrapper_forward.1} parent=1 // pred_fallthru
      _
    %v88 = vld [vmem:[%s0] sm:$0xff]
    %v89 = vpack.c.bf16 %v88, %v88
    %v90 = vld [vmem:[#allocation2] sm:$0xf]
    %v91 = vld [vmem:[#allocation2 + $0x4] sm:$0xf]
    %v92 = vld [vmem:[#allocation2 + $0x8] sm:$0xf]
    %v93 = vld [vmem:[#allocation2 + $0xc] sm:$0xf]
    %v94 = vld [vmem:[#allocation2 + $0x10] sm:$0xf]
    %v95 = vld [vmem:[#allocation2 + $0x14] sm:$0xf]
    %v96 = vld [vmem:[#allocation2 + $0x18] sm:$0xf]
    %v97 = vld [vmem:[#allocation2 + $0x1c] sm:$0xf]
    %v98 = vld [vmem:[#allocation2 + $0x20] sm:$0xf]
    %v99 = vld [vmem:[#allocation2 + $0x24] sm:$0xf]
    %v100 = vld [vmem:[#allocation2 + $0x28] sm:$0xf]
    %v101 = vld [vmem:[#allocation2 + $0x2c] sm:$0xf]
    %v102 = vld [vmem:[#allocation2 + $0x30] sm:$0xf]
    %v103 = vld [vmem:[#allocation2 + $0x34] sm:$0xf]
    %v104 = vld [vmem:[#allocation2 + $0x38] sm:$0xf]
    %v105 = vld [vmem:[#allocation2 + $0x3c] sm:$0xf]
    %v106 = vld [vmem:[%s2] sm:$0x1]
    %v108 = vlaneseq
    %v109 = vshrl.u32 %v108, 7
    %v110 = vsub.s32 0, %v109
    %v111 = vrot.slane %v106, %v110
    %v129 = vunpack.c.l.b16 %v90
    %v130 = vunpack.c.l.b16 %v91
    %v131 = vunpack.c.l.b16 %v92
    %v132 = vunpack.c.l.b16 %v93
    %v133 = vunpack.c.l.b16 %v94
    %v134 = vunpack.c.l.b16 %v95
    %v135 = vunpack.c.l.b16 %v96
    %v136 = vunpack.c.l.b16 %v97
    %v137 = vunpack.c.l.b16 %v98
    %v138 = vunpack.c.l.b16 %v99
    %v139 = vunpack.c.l.b16 %v100
    %v140 = vunpack.c.l.b16 %v101
    %v141 = vunpack.c.l.b16 %v102
    %v142 = vunpack.c.l.b16 %v103
    %v143 = vunpack.c.l.b16 %v104
    %v144 = vunpack.c.l.b16 %v105
    %v145 = vpack.c.b16 %v130, %v129
    %v146 = vpack.c.b16 %v132, %v131
    %v147 = vpack.c.b16 %v134, %v133
    %v148 = vpack.c.b16 %v136, %v135
    %v149 = vpack.c.b16 %v138, %v137
    %v150 = vpack.c.b16 %v140, %v139
    %v151 = vpack.c.b16 %v142, %v141
    %v152 = vpack.c.b16 %v144, %v143
    %161 = vmatprep.subr.bf16.mxu0 0
    %162 = vmatpush1.bf16.msra.mxu0 %v145
    %163 = vmatprep.subr.bf16.mxu0 0
    %164 = vmatpush1.bf16.msra.mxu0 %v146
    %165 = vmatprep.subr.bf16.mxu0 0
    %166 = vmatpush1.bf16.msra.mxu0 %v147
    %167 = vmatprep.subr.bf16.mxu0 0
    %168 = vmatpush1.bf16.msra.mxu0 %v148
    %169 = vmatprep.subr.bf16.mxu0 0
    %170 = vmatpush1.bf16.msra.mxu0 %v149
    %171 = vmatprep.subr.bf16.mxu0 0
    %172 = vmatpush1.bf16.msra.mxu0 %v150
    %173 = vmatprep.subr.bf16.mxu0 0
    %174 = vmatpush1.bf16.msra.mxu0 %v151
    %175 = vmatprep.subr.bf16.mxu0 0
    %176 = vmatpush1.bf16.msra.mxu0 %v152
    %177 = vmatprep.subr.bf16.mxu0 0
    %178 = vmatpush1.bf16.msra.mxu0 0
    %179 = vmatprep.subr.bf16.mxu0 0
    %180 = vmatpush1.bf16.msra.mxu0 0
    %181 = vmatprep.subr.bf16.mxu0 0
    %182 = vmatpush1.bf16.msra.mxu0 0
    %183 = vmatprep.subr.bf16.mxu0 0
    %184 = vmatpush1.bf16.msra.mxu0 0
    %185 = vmatprep.subr.bf16.mxu0 0
    %186 = vmatpush1.bf16.msra.mxu0 0
    %187 = vmatprep.subr.bf16.mxu0 0
    %188 = vmatpush1.bf16.msra.mxu0 0
    %189 = vmatprep.subr.bf16.mxu0 0
    %190 = vmatpush1.bf16.msra.mxu0 0
    %191 = vmatprep.subr.bf16.mxu0 0
    %192 = vmatpush1.bf16.msra.mxu0 0
    %193 = vmatprep.mubr.bf16.mxu0 0
    %194 = vmatmul.mubr.bf16.gmra.mrb[0].mxu0 %v89
    %v195 = vpop.f32.mrb[0].mxu0
    %v196 = vadd.f32 %v111, %v195
    %v197 = vpop.f32.mrb[0].mxu0
    %v198 = vpop.f32.mrb[0].mxu0
    %v199 = vpop.f32.mrb[0].mxu0
    %200 = vdwg.mxu0
    %v201 = vmax.f32 %v196, 0.0
    %v202 = vpack.c.bf16 %v201, %v201
    %v203 = vld [vmem:[#allocation4] sm:$0xf]
    %v204 = vld [vmem:[#allocation4 + $0x4] sm:$0xf]
    %v205 = vld [vmem:[#allocation4 + $0x8] sm:$0xf]
    %v206 = vld [vmem:[#allocation4 + $0xc] sm:$0xf]
    %v207 = vld [vmem:[#allocation4 + $0x10] sm:$0xf]
    %v208 = vld [vmem:[#allocation4 + $0x14] sm:$0xf]
    %v209 = vld [vmem:[#allocation4 + $0x18] sm:$0xf]
    %v210 = vld [vmem:[#allocation4 + $0x1c] sm:$0xf]
    %v211 = vld [vmem:[#allocation4 + $0x20] sm:$0xf]
    %v212 = vld [vmem:[#allocation4 + $0x24] sm:$0xf]
    %v213 = vld [vmem:[#allocation4 + $0x28] sm:$0xf]
    %v214 = vld [vmem:[#allocation4 + $0x2c] sm:$0xf]
    %v215 = vld [vmem:[#allocation4 + $0x30] sm:$0xf]
    %v216 = vld [vmem:[#allocation4 + $0x34] sm:$0xf]
    %v217 = vld [vmem:[#allocation4 + $0x38] sm:$0xf]
    %v218 = vld [vmem:[#allocation4 + $0x3c] sm:$0xf]
    %v219 = vld [vmem:[%s4] sm:$0x1]
    %v221 = vlaneseq
    %v222 = vshrl.u32 %v221, 7
    %v223 = vsub.s32 0, %v222
    %v224 = vrot.slane %v219, %v223
    %v242 = vunpack.c.l.b16 %v203
    %v243 = vunpack.c.l.b16 %v204
    %v244 = vunpack.c.l.b16 %v205
    %v245 = vunpack.c.l.b16 %v206
    %v246 = vunpack.c.l.b16 %v207
    %v247 = vunpack.c.l.b16 %v208
    %v248 = vunpack.c.l.b16 %v209
    %v249 = vunpack.c.l.b16 %v210
    %v250 = vunpack.c.l.b16 %v211
    %v251 = vunpack.c.l.b16 %v212
    %v252 = vunpack.c.l.b16 %v213
    %v253 = vunpack.c.l.b16 %v214
    %v254 = vunpack.c.l.b16 %v215
    %v255 = vunpack.c.l.b16 %v216
    %v256 = vunpack.c.l.b16 %v217
    %v257 = vunpack.c.l.b16 %v218
    %v258 = vpack.c.b16 %v243, %v242
    %v259 = vpack.c.b16 %v245, %v244
    %v260 = vpack.c.b16 %v247, %v246
    %v261 = vpack.c.b16 %v249, %v248
    %v262 = vpack.c.b16 %v251, %v250
    %v263 = vpack.c.b16 %v253, %v252
    %v264 = vpack.c.b16 %v255, %v254
    %v265 = vpack.c.b16 %v257, %v256
    %274 = vmatprep.subr.bf16.mxu0 0
    %275 = vmatpush1.bf16.msra.mxu0 %v258
    %276 = vmatprep.subr.bf16.mxu0 0
    %277 = vmatpush1.bf16.msra.mxu0 %v259
    %278 = vmatprep.subr.bf16.mxu0 0
    %279 = vmatpush1.bf16.msra.mxu0 %v260
    %280 = vmatprep.subr.bf16.mxu0 0
    %281 = vmatpush1.bf16.msra.mxu0 %v261
    %282 = vmatprep.subr.bf16.mxu0 0
    %283 = vmatpush1.bf16.msra.mxu0 %v262
    %284 = vmatprep.subr.bf16.mxu0 0
    %285 = vmatpush1.bf16.msra.mxu0 %v263
    %286 = vmatprep.subr.bf16.mxu0 0
    %287 = vmatpush1.bf16.msra.mxu0 %v264
    %288 = vmatprep.subr.bf16.mxu0 0
    %289 = vmatpush1.bf16.msra.mxu0 %v265
    %290 = vmatprep.subr.bf16.mxu0 0
    %291 = vmatpush1.bf16.msra.mxu0 0
    %292 = vmatprep.subr.bf16.mxu0 0
    %293 = vmatpush1.bf16.msra.mxu0 0
    %294 = vmatprep.subr.bf16.mxu0 0
    %295 = vmatpush1.bf16.msra.mxu0 0
    %296 = vmatprep.subr.bf16.mxu0 0
    %297 = vmatpush1.bf16.msra.mxu0 0
    %298 = vmatprep.subr.bf16.mxu0 0
    %299 = vmatpush1.bf16.msra.mxu0 0
    %300 = vmatprep.subr.bf16.mxu0 0
    %301 = vmatpush1.bf16.msra.mxu0 0
    %302 = vmatprep.subr.bf16.mxu0 0
    %303 = vmatpush1.bf16.msra.mxu0 0
    %304 = vmatprep.subr.bf16.mxu0 0
    %305 = vmatpush1.bf16.msra.mxu0 0
    %306 = vmatprep.mubr.bf16.mxu0 0
    %307 = vmatmul.mubr.bf16.gmra.mrb[0].mxu0 %v202
    %v308 = vpop.f32.mrb[0].mxu0
    %v309 = vadd.f32 %v224, %v308
    %v310 = vpop.f32.mrb[0].mxu0
    %v311 = vpop.f32.mrb[0].mxu0
    %v312 = vpop.f32.mrb[0].mxu0
    %313 = vdwg.mxu0
    %v314 = vpack.c.bf16 %v309, %v309
    %v315 = vld [vmem:[#allocation6] sm:$0xf]
    %v316 = vld [vmem:[#allocation6 + $0x4] sm:$0xf]
    %v317 = vld [vmem:[#allocation6 + $0x8] sm:$0xf]
    %v318 = vld [vmem:[#allocation6 + $0xc] sm:$0xf]
    %v319 = vld [vmem:[#allocation6 + $0x10] sm:$0xf]
    %v320 = vld [vmem:[#allocation6 + $0x14] sm:$0xf]
    %v321 = vld [vmem:[#allocation6 + $0x18] sm:$0xf]
    %v322 = vld [vmem:[#allocation6 + $0x1c] sm:$0xf]
    %v323 = vld [vmem:[#allocation6 + $0x20] sm:$0xf]
    %v324 = vld [vmem:[#allocation6 + $0x24] sm:$0xf]
    %v325 = vld [vmem:[#allocation6 + $0x28] sm:$0xf]
    %v326 = vld [vmem:[#allocation6 + $0x2c] sm:$0xf]
    %v327 = vld [vmem:[#allocation6 + $0x30] sm:$0xf]
    %v328 = vld [vmem:[#allocation6 + $0x34] sm:$0xf]
    %v329 = vld [vmem:[#allocation6 + $0x38] sm:$0xf]
    %v330 = vld [vmem:[#allocation6 + $0x3c] sm:$0xf]
    %v331 = vld [vmem:[%s6] sm:$0x1]
    %v333 = vlaneseq
    %v334 = vshrl.u32 %v333, 7
    %v335 = vsub.s32 0, %v334
    %v336 = vrot.slane %v331, %v335
    %v354 = vunpack.c.l.b16 %v315
    %v355 = vunpack.c.l.b16 %v316
    %v356 = vunpack.c.l.b16 %v317
    %v357 = vunpack.c.l.b16 %v318
    %v358 = vunpack.c.l.b16 %v319
    %v359 = vunpack.c.l.b16 %v320
    %v360 = vunpack.c.l.b16 %v321
    %v361 = vunpack.c.l.b16 %v322
    %v362 = vunpack.c.l.b16 %v323
    %v363 = vunpack.c.l.b16 %v324
    %v364 = vunpack.c.l.b16 %v325
    %v365 = vunpack.c.l.b16 %v326
    %v366 = vunpack.c.l.b16 %v327
    %v367 = vunpack.c.l.b16 %v328
    %v368 = vunpack.c.l.b16 %v329
    %v369 = vunpack.c.l.b16 %v330
    %v370 = vpack.c.b16 %v355, %v354
    %v371 = vpack.c.b16 %v357, %v356
    %v372 = vpack.c.b16 %v359, %v358
    %v373 = vpack.c.b16 %v361, %v360
    %v374 = vpack.c.b16 %v363, %v362
    %v375 = vpack.c.b16 %v365, %v364
    %v376 = vpack.c.b16 %v367, %v366
    %v377 = vpack.c.b16 %v369, %v368
    %386 = vmatprep.subr.bf16.mxu0 0
    %387 = vmatpush1.bf16.msra.mxu0 %v370
    %388 = vmatprep.subr.bf16.mxu0 0
    %389 = vmatpush1.bf16.msra.mxu0 %v371
    %390 = vmatprep.subr.bf16.mxu0 0
    %391 = vmatpush1.bf16.msra.mxu0 %v372
    %392 = vmatprep.subr.bf16.mxu0 0
    %393 = vmatpush1.bf16.msra.mxu0 %v373
    %394 = vmatprep.subr.bf16.mxu0 0
    %395 = vmatpush1.bf16.msra.mxu0 %v374
    %396 = vmatprep.subr.bf16.mxu0 0
    %397 = vmatpush1.bf16.msra.mxu0 %v375
    %398 = vmatprep.subr.bf16.mxu0 0
    %399 = vmatpush1.bf16.msra.mxu0 %v376
    %400 = vmatprep.subr.bf16.mxu0 0
    %401 = vmatpush1.bf16.msra.mxu0 %v377
    %402 = vmatprep.subr.bf16.mxu0 0
    %403 = vmatpush1.bf16.msra.mxu0 0
    %404 = vmatprep.subr.bf16.mxu0 0
    %405 = vmatpush1.bf16.msra.mxu0 0
    %406 = vmatprep.subr.bf16.mxu0 0
    %407 = vmatpush1.bf16.msra.mxu0 0
    %408 = vmatprep.subr.bf16.mxu0 0
    %409 = vmatpush1.bf16.msra.mxu0 0
    %410 = vmatprep.subr.bf16.mxu0 0
    %411 = vmatpush1.bf16.msra.mxu0 0
    %412 = vmatprep.subr.bf16.mxu0 0
    %413 = vmatpush1.bf16.msra.mxu0 0
    %414 = vmatprep.subr.bf16.mxu0 0
    %415 = vmatpush1.bf16.msra.mxu0 0
    %416 = vmatprep.subr.bf16.mxu0 0
    %417 = vmatpush1.bf16.msra.mxu0 0
    %418 = vmatprep.mubr.bf16.mxu0 0
    %419 = vmatmul.mubr.bf16.gmra.mrb[0].mxu0 %v314
    %v420 = vpop.f32.mrb[0].mxu0
    %v421 = vadd.f32 %v336, %v420
    %v422 = vpop.f32.mrb[0].mxu0
    %v423 = vpop.f32.mrb[0].mxu0
    %v424 = vpop.f32.mrb[0].mxu0
    %425 = vdwg.mxu0
    %v426 = vmax.f32 %v421, 0.0
    %v427 = vpack.c.bf16 %v426, %v426
    %v428 = vld [vmem:[#allocation7] sm:$0xf]
    %v429 = vld [vmem:[#allocation7 + $0x4] sm:$0xf]
    %v430 = vld [vmem:[#allocation7 + $0x8] sm:$0xf]
    %v431 = vld [vmem:[#allocation7 + $0xc] sm:$0xf]
    %v432 = vld [vmem:[#allocation7 + $0x10] sm:$0xf]
    %v433 = vld [vmem:[#allocation7 + $0x14] sm:$0xf]
    %v434 = vld [vmem:[#allocation7 + $0x18] sm:$0xf]
    %v435 = vld [vmem:[#allocation7 + $0x1c] sm:$0xf]
    %v436 = vld [vmem:[#allocation7 + $0x20] sm:$0xf]
    %v437 = vld [vmem:[#allocation7 + $0x24] sm:$0xf]
    %v438 = vld [vmem:[#allocation7 + $0x28] sm:$0xf]
    %v439 = vld [vmem:[#allocation7 + $0x2c] sm:$0xf]
    %v440 = vld [vmem:[#allocation7 + $0x30] sm:$0xf]
    %v441 = vld [vmem:[#allocation7 + $0x34] sm:$0xf]
    %v442 = vld [vmem:[#allocation7 + $0x38] sm:$0xf]
    %v443 = vld [vmem:[#allocation7 + $0x3c] sm:$0xf]
    %v444 = vld [vmem:[%s8] sm:$0x1]
    %v446 = vlaneseq
    %v447 = vshrl.u32 %v446, 7
    %v448 = vsub.s32 0, %v447
    %v449 = vrot.slane %v444, %v448
    %v467 = vunpack.c.l.b16 %v428
    %v468 = vunpack.c.l.b16 %v429
    %v469 = vunpack.c.l.b16 %v430
    %v470 = vunpack.c.l.b16 %v431
    %v471 = vunpack.c.l.b16 %v432
    %v472 = vunpack.c.l.b16 %v433
    %v473 = vunpack.c.l.b16 %v434
    %v474 = vunpack.c.l.b16 %v435
    %v475 = vunpack.c.l.b16 %v436
    %v476 = vunpack.c.l.b16 %v437
    %v477 = vunpack.c.l.b16 %v438
    %v478 = vunpack.c.l.b16 %v439
    %v479 = vunpack.c.l.b16 %v440
    %v480 = vunpack.c.l.b16 %v441
    %v481 = vunpack.c.l.b16 %v442
    %v482 = vunpack.c.l.b16 %v443
    %v483 = vpack.c.b16 %v468, %v467
    %v484 = vpack.c.b16 %v470, %v469
    %v485 = vpack.c.b16 %v472, %v471
    %v486 = vpack.c.b16 %v474, %v473
    %v487 = vpack.c.b16 %v476, %v475
    %v488 = vpack.c.b16 %v478, %v477
    %v489 = vpack.c.b16 %v480, %v479
    %v490 = vpack.c.b16 %v482, %v481
    %499 = vmatprep.subr.bf16.mxu0 0
    %500 = vmatpush1.bf16.msra.mxu0 %v483
    %501 = vmatprep.subr.bf16.mxu0 0
    %502 = vmatpush1.bf16.msra.mxu0 %v484
    %503 = vmatprep.subr.bf16.mxu0 0
    %504 = vmatpush1.bf16.msra.mxu0 %v485
    %505 = vmatprep.subr.bf16.mxu0 0
    %506 = vmatpush1.bf16.msra.mxu0 %v486
    %507 = vmatprep.subr.bf16.mxu0 0
    %508 = vmatpush1.bf16.msra.mxu0 %v487
    %509 = vmatprep.subr.bf16.mxu0 0
    %510 = vmatpush1.bf16.msra.mxu0 %v488
    %511 = vmatprep.subr.bf16.mxu0 0
    %512 = vmatpush1.bf16.msra.mxu0 %v489
    %513 = vmatprep.subr.bf16.mxu0 0
    %514 = vmatpush1.bf16.msra.mxu0 %v490
    %515 = vmatprep.subr.bf16.mxu0 0
    %516 = vmatpush1.bf16.msra.mxu0 0
    %517 = vmatprep.subr.bf16.mxu0 0
    %518 = vmatpush1.bf16.msra.mxu0 0
    %519 = vmatprep.subr.bf16.mxu0 0
    %520 = vmatpush1.bf16.msra.mxu0 0
    %521 = vmatprep.subr.bf16.mxu0 0
    %522 = vmatpush1.bf16.msra.mxu0 0
    %523 = vmatprep.subr.bf16.mxu0 0
    %524 = vmatpush1.bf16.msra.mxu0 0
    %525 = vmatprep.subr.bf16.mxu0 0
    %526 = vmatpush1.bf16.msra.mxu0 0
    %527 = vmatprep.subr.bf16.mxu0 0
    %528 = vmatpush1.bf16.msra.mxu0 0
    %529 = vmatprep.subr.bf16.mxu0 0
    %530 = vmatpush1.bf16.msra.mxu0 0
    %531 = vmatprep.mubr.bf16.mxu0 0
    %532 = vmatmul.mubr.bf16.gmra.mrb[0].mxu0 %v427
    %v533 = vpop.f32.mrb[0].mxu0
    %v534 = vadd.f32 %v449, %v533
    %v535 = vpop.f32.mrb[0].mxu0
    %v536 = vpop.f32.mrb[0].mxu0
    %v537 = vpop.f32.mrb[0].mxu0
    %538 = vdwg.mxu0
    %539 = vst [vmem:[%s9] sm:$0xff] %v534
    // Predicated region
    $region54: #{latent_model_wrapper_forward.1} parent=1 // pred_check
      _
    $region55: #{latent_model_wrapper_forward.1} parent=1 // pred_check_branch
      %541 = sbr.rel (0) target = $region57
    $region56: #{latent_model_wrapper_forward.1} parent=1 // pred_region
      _
    $region57: #{latent_model_wrapper_forward.1} parent=1 // pred_fallthru
      _
    // Predicated region
    $region58: #{latent_model_wrapper_forward.1} parent=1 // pred_check
      _
    $region59: #{latent_model_wrapper_forward.1} parent=1 // pred_check_branch
      %543 = sbr.rel (0) target = $region61
    $region60: #{latent_model_wrapper_forward.1} parent=1 // pred_region
      _
    $region61: #{latent_model_wrapper_forward.1} parent=1 // pred_fallthru
      _
    %544 = vsyncpa [#allocation3], 1
    %545 = vsyncpa [#allocation5], 1
    %546 = vsyncpa [#allocation8], 1

</llo_original>
